<compile_context>
chip_gen: v5e
topology: v5e:2x2
jax: 0.10.0
libtpu: 0.0.40
codegen_flags: <defaults>
</compile_context>

<pallas_src>
import math
from functools import partial

import jax
import jax.numpy as jnp
from jax.experimental import pallas as pl
from jax.experimental.pallas import tpu as pltpu


def _acasx_kernel(x_ref, w0_ref, b0_ref, wh_ref, bh_ref, wo_ref, bo_ref,
                  out_ref):
    """Fused 7-layer MLP, feature-major: y = W @ h, h is [features, lanes]."""
    tb = x_ref.shape[1]
    cc = min(tb, 512)          # sub-chunk width (lanes); keep dots >= 512 wide
    n_chunks = tb // cc
    n_hidden = wh_ref.shape[0]  # 5 (fc1..fc5)

    c = 0
    while c < n_chunks:
        # Process chunks in interleaved pairs so the LLO scheduler can overlap
        # MXU pushes of one chunk with VPU bias/ReLU/cast of the other.
        pair = [c] if c + 1 >= n_chunks else [c, c + 1]

        hs = [x_ref[:, cj * cc:(cj + 1) * cc] for cj in pair]  # [5, cc] bf16

        # layer 0: 5 -> 64 (padded from 50)
        accs = [jnp.dot(w0_ref[...], h, preferred_element_type=jnp.float32)
                + b0_ref[...] for h in hs]
        hs = [jnp.maximum(a, 0.0).astype(jnp.bfloat16) for a in accs]

        # hidden layers fc1..fc5: 64 -> 64 (padded from 50), statically unrolled
        for l in range(n_hidden):
            accs = [jnp.dot(wh_ref[l], h, preferred_element_type=jnp.float32)
                    + bh_ref[l] for h in hs]
            hs = [jnp.maximum(a, 0.0).astype(jnp.bfloat16) for a in accs]

        # output layer: 64 -> 5, no ReLU
        outs = [jnp.dot(wo_ref[...], h, preferred_element_type=jnp.float32)
                + bo_ref[...] for h in hs]
        for idx, cj in enumerate(pair):
            out_ref[:, cj * cc:(cj + 1) * cc] = outs[idx].astype(out_ref.dtype)

        c += len(pair)


def _pick_tb(batch, tb_max=2048):
    """Batch tile: as large as possible (up to tb_max) while keeping >=2 grid
    steps when the batch allows it (so both v7x TensorCores get work)."""
    b128 = pl.cdiv(batch, 128) * 128
    half = (b128 // 2) // 128 * 128
    return max(128, min(tb_max, half))


@partial(jax.jit, static_argnames=("tb",))
def acasx_forward(x, params, tb=None):
    """x: [B, 5] float32.

    params: (w0 [64,5] bf16, b0 [64,1] f32,
             wh [5,64,64] bf16, bh [5,64,1] f32,
             wo [5,64] bf16, bo [5,1] f32)   -- hidden dim zero-padded 50 -> 64.
    tb: batch tile (multiple of 128). None -> auto (up to 2048, >=2 grid steps
        when the batch is big enough).
    Returns [B, 5] float32.
    """
    w0, b0, wh, bh, wo, bo = params
    B = x.shape[0]
    if tb is None:
        tb = _pick_tb(B)
    assert tb % 128 == 0
    b_pad = pl.cdiv(B, tb) * tb

    # Feature-major, lane-dense layout: [5, B_pad], batch on the lane axis.
    # (Fused into this jit together with the pallas_call.)
    x_fm = jnp.pad(x, ((0, b_pad - B), (0, 0))).T.astype(jnp.bfloat16)

    out_fm = pl.pallas_call(
        _acasx_kernel,
        out_shape=jax.ShapeDtypeStruct((5, b_pad), jnp.float32),
        grid_spec=pltpu.PrefetchScalarGridSpec(
            num_scalar_prefetch=0,
            grid=(b_pad // tb,),
            in_specs=[
                pl.BlockSpec((5, tb), lambda i: (0, i)),          # x tile
                pl.BlockSpec((64, 5), lambda i: (0, 0)),          # w0 (resident)
                pl.BlockSpec((64, 1), lambda i: (0, 0)),          # b0
                pl.BlockSpec((5, 64, 64), lambda i: (0, 0, 0)),   # stacked hidden W
                pl.BlockSpec((5, 64, 1), lambda i: (0, 0, 0)),    # stacked hidden b
                pl.BlockSpec((5, 64), lambda i: (0, 0)),          # w_out
                pl.BlockSpec((5, 1), lambda i: (0, 0)),           # b_out
            ],
            out_specs=pl.BlockSpec((5, tb), lambda i: (0, i)),
        ),
        compiler_params=pltpu.CompilerParams(
            dimension_semantics=("parallel",),  # megacore sharding on v7x
        ),
    )(x_fm, w0, b0, wh, bh, wo, bo)

    # Back to [B, 5] batch-major (padded rows sliced off).
    return out_fm[:, :B].T


def init_params(key):
    """Deterministic init mimicking torch.nn.Linear defaults
    (uniform(-1/sqrt(fan_in), 1/sqrt(fan_in)) for both W and b).
    Weights stored [out, in] in bf16, hidden dim zero-padded 50 -> 64;
    biases [out, 1] in f32."""
    H, HL = 64, 50

    def linear(k, fan_in, fan_out):
        kw, kb = jax.random.split(k)
        bound = 1.0 / math.sqrt(fan_in)
        w = jax.random.uniform(kw, (fan_out, fan_in), jnp.float32,
                               minval=-bound, maxval=bound)
        b = jax.random.uniform(kb, (fan_out,), jnp.float32,
                               minval=-bound, maxval=bound)
        return w, b

    keys = jax.random.split(key, 7)
    w0, b0 = linear(keys[0], 5, HL)          # fc0: 5 -> 50
    whs, bhs = [], []
    for l in range(5):                        # fc1..fc5: 50 -> 50
        w, b = linear(keys[1 + l], HL, HL)
        whs.append(w)
        bhs.append(b)
    wo, bo = linear(keys[6], HL, 5)           # output: 50 -> 5

    pad = H - HL
    w0p = jnp.pad(w0, ((0, pad), (0, 0)))                               # [64, 5]
    b0p = jnp.pad(b0, (0, pad))[:, None]                                # [64, 1]
    whp = jnp.stack([jnp.pad(w, ((0, pad), (0, pad))) for w in whs])    # [5, 64, 64]
    bhp = jnp.stack([jnp.pad(b, (0, pad))[:, None] for b in bhs])       # [5, 64, 1]
    wop = jnp.pad(wo, ((0, 0), (0, pad)))                               # [5, 64]
    bop = bo[:, None]                                                   # [5, 1]

    return (w0p.astype(jnp.bfloat16), b0p,
            whp.astype(jnp.bfloat16), bhp,
            wop.astype(jnp.bfloat16), bop)


def reference_forward(x, params):
    """Plain-JAX f32 reference of the same math (weights upcast from bf16).
    Padded hidden features carry zeros, so results equal the 50-wide network."""
    w0, b0, wh, bh, wo, bo = params
    h = jnp.maximum(x @ w0.astype(jnp.float32).T + b0[:, 0], 0.0)
    for l in range(wh.shape[0]):
        h = jnp.maximum(h @ wh[l].astype(jnp.float32).T + bh[l, :, 0], 0.0)
    return h @ wo.astype(jnp.float32).T + bo[:, 0]


if __name__ == "__main__":
    key = jax.random.PRNGKey(0)
    key, kx1, kx2 = jax.random.split(key, 3)
    params = init_params(key)

    # Small batch: single 128-wide tile, single chunk chain.
    x_small = jax.random.normal(kx1, (8, 5), jnp.float32)
    out_small = jax.block_until_ready(acasx_forward(x_small, params))
    ref_small = reference_forward(x_small, params)
    assert out_small.shape == (8, 5)
    # bf16 MXU activations -> relaxed tolerance vs the f32 reference.
    assert jnp.allclose(out_small, ref_small, atol=3e-2, rtol=3e-2), \
        "mismatch vs reference (small batch)"

    # Medium batch with an explicit 1024-wide tile: exercises the interleaved
    # 2x512-lane chunk-pair path and the padded-batch slicing.
    x_med = jax.random.normal(kx2, (300, 5), jnp.float32)
    out_med = jax.block_until_ready(acasx_forward(x_med, params, tb=1024))
    ref_med = reference_forward(x_med, params)
    assert out_med.shape == (300, 5)
    assert jnp.allclose(out_med, ref_med, atol=3e-2, rtol=3e-2), \
        "mismatch vs reference (medium batch)"

    # TODO(synk): torch forward also prints out.mean(); omitted to keep stdout
    # to exactly "KERNEL_OK".
    print("KERNEL_OK")
</pallas_src>

<mosaic_0001>
module attributes {stable_mosaic.version = 11 : i64} {
  func.func @_acasx_kernel(%arg0: i32, %arg1: memref<5x128xbf16, #tpu.memory_space<vmem>>, %arg2: memref<64x5xbf16, #tpu.memory_space<vmem>>, %arg3: memref<64x1xf32, #tpu.memory_space<vmem>>, %arg4: memref<5x64x64xbf16, #tpu.memory_space<vmem>>, %arg5: memref<5x64x1xf32, #tpu.memory_space<vmem>>, %arg6: memref<5x64xbf16, #tpu.memory_space<vmem>>, %arg7: memref<5x1xf32, #tpu.memory_space<vmem>>, %arg8: memref<5x128xf32, #tpu.memory_space<vmem>>) attributes {dimension_semantics = [#tpu.dimension_semantics<parallel>], iteration_bounds = array<i64: 1>, scalar_prefetch = 0 : i64, scratch_operands = 0 : i64, tpu.core_type = #tpu.core_type<tc>, window_params = [{transform_indices = @transform_0, window_bounds = array<i64: 5, 128>}, {pipeline_mode = #tpu.pipeline_mode<synchronous>, transform_indices = @transform_1, window_bounds = array<i64: 64, 5>}, {pipeline_mode = #tpu.pipeline_mode<synchronous>, transform_indices = @transform_2, window_bounds = array<i64: 64, 1>}, {pipeline_mode = #tpu.pipeline_mode<synchronous>, transform_indices = @transform_3, window_bounds = array<i64: 5, 64, 64>}, {pipeline_mode = #tpu.pipeline_mode<synchronous>, transform_indices = @transform_4, window_bounds = array<i64: 5, 64, 1>}, {pipeline_mode = #tpu.pipeline_mode<synchronous>, transform_indices = @transform_5, window_bounds = array<i64: 5, 64>}, {pipeline_mode = #tpu.pipeline_mode<synchronous>, transform_indices = @transform_6, window_bounds = array<i64: 5, 1>}, {transform_indices = @transform_7, window_bounds = array<i64: 5, 128>}]} {
    %c0 = arith.constant 0 : index
    %c0_0 = arith.constant 0 : index
    %0 = vector.load %arg1[%c0, %c0_0] : memref<5x128xbf16, #tpu.memory_space<vmem>>, vector<5x128xbf16>
    %c0_1 = arith.constant 0 : index
    %c0_2 = arith.constant 0 : index
    %1 = vector.load %arg2[%c0_1, %c0_2] : memref<64x5xbf16, #tpu.memory_space<vmem>>, vector<64x5xbf16>
    %cst = arith.constant dense<0.000000e+00> : vector<64x128xf32>
    %2 = tpu.matmul %1, %0, %cst {dimension_numbers = #tpu.dot_dimension_numbers<[1], [0], [0], [1], [0, 0, 1, 1], [], []>} : vector<64x5xbf16>, vector<5x128xbf16>, vector<64x128xf32> -> vector<64x128xf32>
    %c0_3 = arith.constant 0 : index
    %c0_4 = arith.constant 0 : index
    %3 = vector.load %arg3[%c0_3, %c0_4] : memref<64x1xf32, #tpu.memory_space<vmem>>, vector<64x1xf32>
    %4 = vector.broadcast %3 : vector<64x1xf32> to vector<64x128xf32>
    %5 = arith.addf %2, %4 : vector<64x128xf32>
    %cst_5 = arith.constant 0.000000e+00 : f32
    %6 = vector.broadcast %cst_5 : f32 to vector<64x128xf32>
    %7 = arith.maximumf %5, %6 : vector<64x128xf32>
    %8 = arith.truncf %7 : vector<64x128xf32> to vector<64x128xbf16>
    %c0_6 = arith.constant 0 : index
    %c0_7 = arith.constant 0 : index
    %c0_8 = arith.constant 0 : index
    %9 = vector.load %arg4[%c0_6, %c0_7, %c0_8] : memref<5x64x64xbf16, #tpu.memory_space<vmem>>, vector<1x64x64xbf16>
    %10 = vector.shape_cast %9 : vector<1x64x64xbf16> to vector<64x64xbf16>
    %cst_9 = arith.constant dense<0.000000e+00> : vector<64x128xf32>
    %11 = tpu.matmul %10, %8, %cst_9 {dimension_numbers = #tpu.dot_dimension_numbers<[1], [0], [0], [1], [0, 0, 1, 1], [], []>} : vector<64x64xbf16>, vector<64x128xbf16>, vector<64x128xf32> -> vector<64x128xf32>
    %c0_10 = arith.constant 0 : index
    %c0_11 = arith.constant 0 : index
    %c0_12 = arith.constant 0 : index
    %12 = vector.load %arg5[%c0_10, %c0_11, %c0_12] : memref<5x64x1xf32, #tpu.memory_space<vmem>>, vector<1x64x1xf32>
    %13 = vector.shape_cast %12 : vector<1x64x1xf32> to vector<64x1xf32>
    %14 = vector.broadcast %13 : vector<64x1xf32> to vector<64x128xf32>
    %15 = arith.addf %11, %14 : vector<64x128xf32>
    %cst_13 = arith.constant 0.000000e+00 : f32
    %16 = vector.broadcast %cst_13 : f32 to vector<64x128xf32>
    %17 = arith.maximumf %15, %16 : vector<64x128xf32>
    %18 = arith.truncf %17 : vector<64x128xf32> to vector<64x128xbf16>
    %c1 = arith.constant 1 : index
    %c0_14 = arith.constant 0 : index
    %c0_15 = arith.constant 0 : index
    %19 = vector.load %arg4[%c1, %c0_14, %c0_15] : memref<5x64x64xbf16, #tpu.memory_space<vmem>>, vector<1x64x64xbf16>
    %20 = vector.shape_cast %19 : vector<1x64x64xbf16> to vector<64x64xbf16>
    %cst_16 = arith.constant dense<0.000000e+00> : vector<64x128xf32>
    %21 = tpu.matmul %20, %18, %cst_16 {dimension_numbers = #tpu.dot_dimension_numbers<[1], [0], [0], [1], [0, 0, 1, 1], [], []>} : vector<64x64xbf16>, vector<64x128xbf16>, vector<64x128xf32> -> vector<64x128xf32>
    %c1_17 = arith.constant 1 : index
    %c0_18 = arith.constant 0 : index
    %c0_19 = arith.constant 0 : index
    %22 = vector.load %arg5[%c1_17, %c0_18, %c0_19] : memref<5x64x1xf32, #tpu.memory_space<vmem>>, vector<1x64x1xf32>
    %23 = vector.shape_cast %22 : vector<1x64x1xf32> to vector<64x1xf32>
    %24 = vector.broadcast %23 : vector<64x1xf32> to vector<64x128xf32>
    %25 = arith.addf %21, %24 : vector<64x128xf32>
    %cst_20 = arith.constant 0.000000e+00 : f32
    %26 = vector.broadcast %cst_20 : f32 to vector<64x128xf32>
    %27 = arith.maximumf %25, %26 : vector<64x128xf32>
    %28 = arith.truncf %27 : vector<64x128xf32> to vector<64x128xbf16>
    %c2 = arith.constant 2 : index
    %c0_21 = arith.constant 0 : index
    %c0_22 = arith.constant 0 : index
    %29 = vector.load %arg4[%c2, %c0_21, %c0_22] : memref<5x64x64xbf16, #tpu.memory_space<vmem>>, vector<1x64x64xbf16>
    %30 = vector.shape_cast %29 : vector<1x64x64xbf16> to vector<64x64xbf16>
    %cst_23 = arith.constant dense<0.000000e+00> : vector<64x128xf32>
    %31 = tpu.matmul %30, %28, %cst_23 {dimension_numbers = #tpu.dot_dimension_numbers<[1], [0], [0], [1], [0, 0, 1, 1], [], []>} : vector<64x64xbf16>, vector<64x128xbf16>, vector<64x128xf32> -> vector<64x128xf32>
    %c2_24 = arith.constant 2 : index
    %c0_25 = arith.constant 0 : index
    %c0_26 = arith.constant 0 : index
    %32 = vector.load %arg5[%c2_24, %c0_25, %c0_26] : memref<5x64x1xf32, #tpu.memory_space<vmem>>, vector<1x64x1xf32>
    %33 = vector.shape_cast %32 : vector<1x64x1xf32> to vector<64x1xf32>
    %34 = vector.broadcast %33 : vector<64x1xf32> to vector<64x128xf32>
    %35 = arith.addf %31, %34 : vector<64x128xf32>
    %cst_27 = arith.constant 0.000000e+00 : f32
    %36 = vector.broadcast %cst_27 : f32 to vector<64x128xf32>
    %37 = arith.maximumf %35, %36 : vector<64x128xf32>
    %38 = arith.truncf %37 : vector<64x128xf32> to vector<64x128xbf16>
    %c3 = arith.constant 3 : index
    %c0_28 = arith.constant 0 : index
    %c0_29 = arith.constant 0 : index
    %39 = vector.load %arg4[%c3, %c0_28, %c0_29] : memref<5x64x64xbf16, #tpu.memory_space<vmem>>, vector<1x64x64xbf16>
    %40 = vector.shape_cast %39 : vector<1x64x64xbf16> to vector<64x64xbf16>
    %cst_30 = arith.constant dense<0.000000e+00> : vector<64x128xf32>
    %41 = tpu.matmul %40, %38, %cst_30 {dimension_numbers = #tpu.dot_dimension_numbers<[1], [0], [0], [1], [0, 0, 1, 1], [], []>} : vector<64x64xbf16>, vector<64x128xbf16>, vector<64x128xf32> -> vector<64x128xf32>
    %c3_31 = arith.constant 3 : index
    %c0_32 = arith.constant 0 : index
    %c0_33 = arith.constant 0 : index
    %42 = vector.load %arg5[%c3_31, %c0_32, %c0_33] : memref<5x64x1xf32, #tpu.memory_space<vmem>>, vector<1x64x1xf32>
    %43 = vector.shape_cast %42 : vector<1x64x1xf32> to vector<64x1xf32>
    %44 = vector.broadcast %43 : vector<64x1xf32> to vector<64x128xf32>
    %45 = arith.addf %41, %44 : vector<64x128xf32>
    %cst_34 = arith.constant 0.000000e+00 : f32
    %46 = vector.broadcast %cst_34 : f32 to vector<64x128xf32>
    %47 = arith.maximumf %45, %46 : vector<64x128xf32>
    %48 = arith.truncf %47 : vector<64x128xf32> to vector<64x128xbf16>
    %c4 = arith.constant 4 : index
    %c0_35 = arith.constant 0 : index
    %c0_36 = arith.constant 0 : index
    %49 = vector.load %arg4[%c4, %c0_35, %c0_36] : memref<5x64x64xbf16, #tpu.memory_space<vmem>>, vector<1x64x64xbf16>
    %50 = vector.shape_cast %49 : vector<1x64x64xbf16> to vector<64x64xbf16>
    %cst_37 = arith.constant dense<0.000000e+00> : vector<64x128xf32>
    %51 = tpu.matmul %50, %48, %cst_37 {dimension_numbers = #tpu.dot_dimension_numbers<[1], [0], [0], [1], [0, 0, 1, 1], [], []>} : vector<64x64xbf16>, vector<64x128xbf16>, vector<64x128xf32> -> vector<64x128xf32>
    %c4_38 = arith.constant 4 : index
    %c0_39 = arith.constant 0 : index
    %c0_40 = arith.constant 0 : index
    %52 = vector.load %arg5[%c4_38, %c0_39, %c0_40] : memref<5x64x1xf32, #tpu.memory_space<vmem>>, vector<1x64x1xf32>
    %53 = vector.shape_cast %52 : vector<1x64x1xf32> to vector<64x1xf32>
    %54 = vector.broadcast %53 : vector<64x1xf32> to vector<64x128xf32>
    %55 = arith.addf %51, %54 : vector<64x128xf32>
    %cst_41 = arith.constant 0.000000e+00 : f32
    %56 = vector.broadcast %cst_41 : f32 to vector<64x128xf32>
    %57 = arith.maximumf %55, %56 : vector<64x128xf32>
    %58 = arith.truncf %57 : vector<64x128xf32> to vector<64x128xbf16>
    %c0_42 = arith.constant 0 : index
    %c0_43 = arith.constant 0 : index
    %59 = vector.load %arg6[%c0_42, %c0_43] : memref<5x64xbf16, #tpu.memory_space<vmem>>, vector<5x64xbf16>
    %cst_44 = arith.constant dense<0.000000e+00> : vector<5x128xf32>
    %60 = tpu.matmul %59, %58, %cst_44 {dimension_numbers = #tpu.dot_dimension_numbers<[1], [0], [0], [1], [0, 0, 1, 1], [], []>} : vector<5x64xbf16>, vector<64x128xbf16>, vector<5x128xf32> -> vector<5x128xf32>
    %c0_45 = arith.constant 0 : index
    %c0_46 = arith.constant 0 : index
    %61 = vector.load %arg7[%c0_45, %c0_46] : memref<5x1xf32, #tpu.memory_space<vmem>>, vector<5x1xf32>
    %62 = vector.broadcast %61 : vector<5x1xf32> to vector<5x128xf32>
    %63 = arith.addf %60, %62 : vector<5x128xf32>
    %c0_47 = arith.constant 0 : index
    %c0_48 = arith.constant 0 : index
    %64 = vector.load %arg8[%c0_47, %c0_48] : memref<5x128xf32, #tpu.memory_space<vmem>>, vector<5x128xf32>
    tpu.vector_store %arg8[%c0_47, %c0_48], %63 {strides = array<i32>} : memref<5x128xf32, #tpu.memory_space<vmem>>, vector<5x128xf32>,
    return
  }
  func.func @transform_0(%arg0: i32) -> (i32, i32) {
    %c0_i32 = arith.constant 0 : i32
    %c0_i32_0 = arith.constant 0 : i32
    return %c0_i32, %arg0 : i32, i32
  }
  func.func @transform_1(%arg0: i32) -> (i32, i32) {
    %c0_i32 = arith.constant 0 : i32
    %c0_i32_0 = arith.constant 0 : i32
    %c0_i32_1 = arith.constant 0 : i32
    return %c0_i32, %c0_i32_0 : i32, i32
  }
  func.func @transform_2(%arg0: i32) -> (i32, i32) {
    %c0_i32 = arith.constant 0 : i32
    %c0_i32_0 = arith.constant 0 : i32
    %c0_i32_1 = arith.constant 0 : i32
    return %c0_i32, %c0_i32_0 : i32, i32
  }
  func.func @transform_3(%arg0: i32) -> (i32, i32, i32) {
    %c0_i32 = arith.constant 0 : i32
    %c0_i32_0 = arith.constant 0 : i32
    %c0_i32_1 = arith.constant 0 : i32
    %c0_i32_2 = arith.constant 0 : i32
    return %c0_i32, %c0_i32_0, %c0_i32_1 : i32, i32, i32
  }
  func.func @transform_4(%arg0: i32) -> (i32, i32, i32) {
    %c0_i32 = arith.constant 0 : i32
    %c0_i32_0 = arith.constant 0 : i32
    %c0_i32_1 = arith.constant 0 : i32
    %c0_i32_2 = arith.constant 0 : i32
    return %c0_i32, %c0_i32_0, %c0_i32_1 : i32, i32, i32
  }
  func.func @transform_5(%arg0: i32) -> (i32, i32) {
    %c0_i32 = arith.constant 0 : i32
    %c0_i32_0 = arith.constant 0 : i32
    %c0_i32_1 = arith.constant 0 : i32
    return %c0_i32, %c0_i32_0 : i32, i32
  }
  func.func @transform_6(%arg0: i32) -> (i32, i32) {
    %c0_i32 = arith.constant 0 : i32
    %c0_i32_0 = arith.constant 0 : i32
    %c0_i32_1 = arith.constant 0 : i32
    return %c0_i32, %c0_i32_0 : i32, i32
  }
  func.func @transform_7(%arg0: i32) -> (i32, i32) {
    %c0_i32 = arith.constant 0 : i32
    %c0_i32_0 = arith.constant 0 : i32
    return %c0_i32, %arg0 : i32, i32
  }
}

</mosaic_0001>

<llo_original>
// kernel: acasx_forward.1
$region0: #{acasx_forward.1}
  #allocation0 [shape = 'u32[]', space=smem, size = 0x4, offset = 0x4, fixed_abs, tag = 'smem constant byte address 0x4 - core index']
  #allocation1 [shape = 'u32[72,128]{1,0:T(1,128)}', space=vmem, size = 0x9000, scoped, tag = 'internal scratch']
  %s0 = inlined_call_operand.vmem [shape: bf16[5,128], index: 0, kind: input, shape index: {}]
  %s1 = inlined_call_operand.vmem [shape: bf16[64,5], index: 1, kind: input, shape index: {}]
  %s2 = inlined_call_operand.vmem [shape: f32[64,1], index: 2, kind: input, shape index: {}]
  %s3 = inlined_call_operand.vmem [shape: bf16[5,64,64], index: 3, kind: input, shape index: {}]
  %s4 = inlined_call_operand.vmem [shape: f32[5,64,1], index: 4, kind: input, shape index: {}]
  %s5 = inlined_call_operand.vmem [shape: bf16[5,64], index: 5, kind: input, shape index: {}]
  %s6 = inlined_call_operand.vmem [shape: f32[5,1], index: 6, kind: input, shape index: {}]
  %s7 = inlined_call_operand.vmem [shape: f32[5,128], index: 7, kind: output, shape index: {}]
  %s8 = sld [smem:[#allocation0]]
  $region38: #{acasx_forward.1} parent=0
    _
  %s10 = ssub.s32 1, %s8
  %s11 = scalar_select 0, %s10, %s8
  // Predicated region
  $region2: #{acasx_forward.1} parent=0 // pred_check
    _
  $region3: #{acasx_forward.1} parent=0 // pred_check_branch
    %13 = sbr.rel (0) target = $region5
  $region4: #{acasx_forward.1} parent=0 // pred_region
    _
  $region5: #{acasx_forward.1} parent=0 // pred_fallthru
    _
  // Predicated region
  $region6: #{acasx_forward.1} parent=0 // pred_check
    _
  $region7: #{acasx_forward.1} parent=0 // pred_check_branch
    %15 = sbr.rel (0) target = $region9
  $region8: #{acasx_forward.1} parent=0 // pred_region
    _
  $region9: #{acasx_forward.1} parent=0 // pred_fallthru
    _
  // Predicated region
  $region10: #{acasx_forward.1} parent=0 // pred_check
    _
  $region11: #{acasx_forward.1} parent=0 // pred_check_branch
    %17 = sbr.rel (0) target = $region13
  $region12: #{acasx_forward.1} parent=0 // pred_region
    _
  $region13: #{acasx_forward.1} parent=0 // pred_fallthru
    _
  // Predicated region
  $region14: #{acasx_forward.1} parent=0 // pred_check
    _
  $region15: #{acasx_forward.1} parent=0 // pred_check_branch
    %19 = sbr.rel (0) target = $region17
  $region16: #{acasx_forward.1} parent=0 // pred_region
    _
  $region17: #{acasx_forward.1} parent=0 // pred_fallthru
    _
  // Predicated region
  $region18: #{acasx_forward.1} parent=0 // pred_check
    _
  $region19: #{acasx_forward.1} parent=0 // pred_check_branch
    %21 = sbr.rel (0) target = $region21
  $region20: #{acasx_forward.1} parent=0 // pred_region
    _
  $region21: #{acasx_forward.1} parent=0 // pred_fallthru
    _
  // Predicated region
  $region22: #{acasx_forward.1} parent=0 // pred_check
    _
  $region23: #{acasx_forward.1} parent=0 // pred_check_branch
    %23 = sbr.rel (0) target = $region25
  $region24: #{acasx_forward.1} parent=0 // pred_region
    _
  $region25: #{acasx_forward.1} parent=0 // pred_fallthru
    _
  // Predicated region
  $region26: #{acasx_forward.1} parent=0 // pred_check
    _
  $region27: #{acasx_forward.1} parent=0 // pred_check_branch
    %25 = sbr.rel (0) target = $region29
  $region28: #{acasx_forward.1} parent=0 // pred_region
    _
  $region29: #{acasx_forward.1} parent=0 // pred_fallthru
    _
  %v27 = vld [vmem:[%s0] sm:$0x7]
  %v28 = vld [vmem:[%s1] sm:$0xf]
  %v29 = vld [vmem:[%s1 + $0x4] sm:$0xf]
  %v30 = vld [vmem:[%s1 + $0x8] sm:$0xf]
  %v31 = vld [vmem:[%s1 + $0xc] sm:$0xf]
  %v32 = vld [vmem:[%s1 + $0x10] sm:$0xf]
  %v33 = vld [vmem:[%s1 + $0x14] sm:$0xf]
  %v34 = vld [vmem:[%s1 + $0x18] sm:$0xf]
  %v35 = vld [vmem:[%s1 + $0x1c] sm:$0xf]
  %v36 = vld [vmem:[%s2] sm:$0xff]
  %v37 = vld [vmem:[%s2 + $0x8] sm:$0xff]
  %v38 = vld [vmem:[%s2 + $0x10] sm:$0xff]
  %v39 = vld [vmem:[%s2 + $0x18] sm:$0xff]
  %v40 = vld [vmem:[%s2 + $0x20] sm:$0xff]
  %v41 = vld [vmem:[%s2 + $0x28] sm:$0xff]
  %v42 = vld [vmem:[%s2 + $0x30] sm:$0xff]
  %v43 = vld [vmem:[%s2 + $0x38] sm:$0xff]
  %45 = vset.pattern.permute.xlu0 0
  %46 = vperm.xlu0 %45, %v36
  %v47 = vpop.permute.xlu0 %46
  %50 = vset.pattern.permute.xlu0 0
  %51 = vperm.xlu0 %50, %v37
  %v52 = vpop.permute.xlu0 %51
  %55 = vset.pattern.permute.xlu0 0
  %56 = vperm.xlu0 %55, %v38
  %v57 = vpop.permute.xlu0 %56
  %60 = vset.pattern.permute.xlu0 0
  %61 = vperm.xlu0 %60, %v39
  %v62 = vpop.permute.xlu0 %61
  %65 = vset.pattern.permute.xlu0 0
  %66 = vperm.xlu0 %65, %v40
  %v67 = vpop.permute.xlu0 %66
  %70 = vset.pattern.permute.xlu0 0
  %71 = vperm.xlu0 %70, %v41
  %v72 = vpop.permute.xlu0 %71
  %75 = vset.pattern.permute.xlu0 0
  %76 = vperm.xlu0 %75, %v42
  %v77 = vpop.permute.xlu0 %76
  %80 = vset.pattern.permute.xlu0 0
  %81 = vperm.xlu0 %80, %v43
  %v82 = vpop.permute.xlu0 %81
  %v92 = vunpack.c.l.b16 %v28
  %v93 = vunpack.c.l.b16 %v29
  %v94 = vunpack.c.l.b16 %v30
  %v95 = vunpack.c.l.b16 %v31
  %v96 = vunpack.c.l.b16 %v32
  %v97 = vunpack.c.l.b16 %v33
  %v98 = vunpack.c.l.b16 %v34
  %v99 = vunpack.c.l.b16 %v35
  %v100 = vpack.c.b16 %v93, %v92
  %v101 = vpack.c.b16 %v95, %v94
  %v102 = vpack.c.b16 %v97, %v96
  %v103 = vpack.c.b16 %v99, %v98
  %vm104 = vcmask 39936
  %v106 = vsel %vm104, %v100, 0
  %v109 = vsel %vm104, %v101, 0
  %v112 = vsel %vm104, %v102, 0
  %v115 = vsel %vm104, %v103, 0
  %vm117 = vcmask 1041408
  %vm118 = vcmask 1042432
  %v119 = vsel %vm117, 4294967295, 65535
  %v120 = vsel %vm118, %v119, 0
  %v122 = vand.u32 %v27, %v120
  %124 = vmatpush.bf16.msra.mxu0 0
  %125 = vmatpush.bf16.msra.mxu0 0
  %126 = vmatpush.bf16.msra.mxu0 0
  %127 = vmatpush.bf16.msra.mxu0 0
  %128 = vmatpush.bf16.msra.mxu0 0
  %129 = vmatpush.bf16.msra.mxu0 0
  %130 = vmatpush.bf16.msra.mxu0 0
  %131 = vmatpush.bf16.msra.mxu0 %v122
  %132 = vmatmul.bf16.gmra.mxu0 %v106
  %v133 = vpop.f32.mrf.mxu0
  %v134 = vadd.f32 %v47, %v133
  %v135 = vpop.f32.mrf.mxu0
  %v136 = vadd.f32 %v52, %v135
  %137 = vmatmul.bf16.gmra.mxu0 %v109
  %v138 = vpop.f32.mrf.mxu0
  %v139 = vadd.f32 %v57, %v138
  %v140 = vpop.f32.mrf.mxu0
  %v141 = vadd.f32 %v62, %v140
  %142 = vmatmul.bf16.gmra.mxu0 %v112
  %v143 = vpop.f32.mrf.mxu0
  %v144 = vadd.f32 %v67, %v143
  %v145 = vpop.f32.mrf.mxu0
  %v146 = vadd.f32 %v72, %v145
  %147 = vmatmul.bf16.gmra.mxu0 %v115
  %v148 = vpop.f32.mrf.mxu0
  %v149 = vadd.f32 %v77, %v148
  %v150 = vpop.f32.mrf.mxu0
  %v151 = vadd.f32 %v82, %v150
  %152 = vdwg.mxu0
  %v153 = vmax.f32 %v134, 0.0
  %v154 = vmax.f32 %v136, 0.0
  %v155 = vmax.f32 %v139, 0.0
  %v156 = vmax.f32 %v141, 0.0
  %v157 = vmax.f32 %v144, 0.0
  %v158 = vmax.f32 %v146, 0.0
  %v159 = vmax.f32 %v149, 0.0
  %v160 = vmax.f32 %v151, 0.0
  %v161 = vpack.c.bf16 %v154, %v153
  %v162 = vpack.c.bf16 %v156, %v155
  %v163 = vpack.c.bf16 %v158, %v157
  %v164 = vpack.c.bf16 %v160, %v159
  %v165 = vld [vmem:[%s3] sm:$0xf]
  %v166 = vld [vmem:[%s3 + $0x4] sm:$0xf]
  %v167 = vld [vmem:[%s3 + $0x8] sm:$0xf]
  %v168 = vld [vmem:[%s3 + $0xc] sm:$0xf]
  %v169 = vld [vmem:[%s3 + $0x10] sm:$0xf]
  %v170 = vld [vmem:[%s3 + $0x14] sm:$0xf]
  %v171 = vld [vmem:[%s3 + $0x18] sm:$0xf]
  %v172 = vld [vmem:[%s3 + $0x1c] sm:$0xf]
  %v173 = vld [vmem:[%s4] sm:$0xff]
  %v174 = vld [vmem:[%s4 + $0x8] sm:$0xff]
  %v175 = vld [vmem:[%s4 + $0x10] sm:$0xff]
  %v176 = vld [vmem:[%s4 + $0x18] sm:$0xff]
  %v177 = vld [vmem:[%s4 + $0x20] sm:$0xff]
  %v178 = vld [vmem:[%s4 + $0x28] sm:$0xff]
  %v179 = vld [vmem:[%s4 + $0x30] sm:$0xff]
  %v180 = vld [vmem:[%s4 + $0x38] sm:$0xff]
  %182 = vset.pattern.permute.xlu0 0
  %183 = vperm.xlu0 %182, %v173
  %v184 = vpop.permute.xlu0 %183
  %187 = vset.pattern.permute.xlu0 0
  %188 = vperm.xlu0 %187, %v174
  %v189 = vpop.permute.xlu0 %188
  %192 = vset.pattern.permute.xlu0 0
  %193 = vperm.xlu0 %192, %v175
  %v194 = vpop.permute.xlu0 %193
  %197 = vset.pattern.permute.xlu0 0
  %198 = vperm.xlu0 %197, %v176
  %v199 = vpop.permute.xlu0 %198
  %202 = vset.pattern.permute.xlu0 0
  %203 = vperm.xlu0 %202, %v177
  %v204 = vpop.permute.xlu0 %203
  %207 = vset.pattern.permute.xlu0 0
  %208 = vperm.xlu0 %207, %v178
  %v209 = vpop.permute.xlu0 %208
  %212 = vset.pattern.permute.xlu0 0
  %213 = vperm.xlu0 %212, %v179
  %v214 = vpop.permute.xlu0 %213
  %217 = vset.pattern.permute.xlu0 0
  %218 = vperm.xlu0 %217, %v180
  %v219 = vpop.permute.xlu0 %218
  %v229 = vunpack.c.l.b16 %v165
  %v230 = vunpack.c.l.b16 %v166
  %v231 = vunpack.c.l.b16 %v167
  %v232 = vunpack.c.l.b16 %v168
  %v233 = vunpack.c.l.b16 %v169
  %v234 = vunpack.c.l.b16 %v170
  %v235 = vunpack.c.l.b16 %v171
  %v236 = vunpack.c.l.b16 %v172
  %v237 = vpack.c.b16 %v230, %v229
  %v238 = vpack.c.b16 %v232, %v231
  %v239 = vpack.c.b16 %v234, %v233
  %v240 = vpack.c.b16 %v236, %v235
  %vm241 = vcmask 523264
  %v243 = vsel %vm241, %v237, 0
  %v246 = vsel %vm241, %v238, 0
  %v249 = vsel %vm241, %v239, 0
  %v252 = vsel %vm241, %v240, 0
  %254 = vmatpush.bf16.msra.mxu0 0
  %255 = vmatpush.bf16.msra.mxu0 0
  %256 = vmatpush.bf16.msra.mxu0 0
  %257 = vmatpush.bf16.msra.mxu0 0
  %258 = vmatpush.bf16.msra.mxu0 %v164
  %259 = vmatpush.bf16.msra.mxu0 %v163
  %260 = vmatpush.bf16.msra.mxu0 %v162
  %261 = vmatpush.bf16.msra.mxu0 %v161
  %262 = vmatmul.bf16.gmra.mxu0 %v243
  %v263 = vpop.f32.mrf.mxu0
  %v264 = vadd.f32 %v184, %v263
  %v265 = vpop.f32.mrf.mxu0
  %v266 = vadd.f32 %v189, %v265
  %267 = vmatmul.bf16.gmra.mxu0 %v246
  %v268 = vpop.f32.mrf.mxu0
  %v269 = vadd.f32 %v194, %v268
  %v270 = vpop.f32.mrf.mxu0
  %v271 = vadd.f32 %v199, %v270
  %272 = vmatmul.bf16.gmra.mxu0 %v249
  %v273 = vpop.f32.mrf.mxu0
  %v274 = vadd.f32 %v204, %v273
  %v275 = vpop.f32.mrf.mxu0
  %v276 = vadd.f32 %v209, %v275
  %277 = vmatmul.bf16.gmra.mxu0 %v252
  %v278 = vpop.f32.mrf.mxu0
  %v279 = vadd.f32 %v214, %v278
  %v280 = vpop.f32.mrf.mxu0
  %v281 = vadd.f32 %v219, %v280
  %282 = vdwg.mxu0
  %v283 = vmax.f32 %v264, 0.0
  %v284 = vmax.f32 %v266, 0.0
  %v285 = vmax.f32 %v269, 0.0
  %v286 = vmax.f32 %v271, 0.0
  %v287 = vmax.f32 %v274, 0.0
  %v288 = vmax.f32 %v276, 0.0
  %v289 = vmax.f32 %v279, 0.0
  %v290 = vmax.f32 %v281, 0.0
  %v291 = vpack.c.bf16 %v284, %v283
  %v292 = vpack.c.bf16 %v286, %v285
  %v293 = vpack.c.bf16 %v288, %v287
  %v294 = vpack.c.bf16 %v290, %v289
  %s295 = scalar_lea.vmem %s3, 32
  %v296 = vld [vmem:[%s295] sm:$0xf]
  %v297 = vld [vmem:[%s295 + $0x4] sm:$0xf]
  %v298 = vld [vmem:[%s295 + $0x8] sm:$0xf]
  %v299 = vld [vmem:[%s295 + $0xc] sm:$0xf]
  %v300 = vld [vmem:[%s295 + $0x10] sm:$0xf]
  %v301 = vld [vmem:[%s295 + $0x14] sm:$0xf]
  %v302 = vld [vmem:[%s295 + $0x18] sm:$0xf]
  %v303 = vld [vmem:[%s295 + $0x1c] sm:$0xf]
  %s304 = scalar_lea.vmem %s4, 64
  %v305 = vld [vmem:[%s304] sm:$0xff]
  %v306 = vld [vmem:[%s304 + $0x8] sm:$0xff]
  %v307 = vld [vmem:[%s304 + $0x10] sm:$0xff]
  %v308 = vld [vmem:[%s304 + $0x18] sm:$0xff]
  %v309 = vld [vmem:[%s304 + $0x20] sm:$0xff]
  %v310 = vld [vmem:[%s304 + $0x28] sm:$0xff]
  %v311 = vld [vmem:[%s304 + $0x30] sm:$0xff]
  %v312 = vld [vmem:[%s304 + $0x38] sm:$0xff]
  %314 = vset.pattern.permute.xlu0 0
  %315 = vperm.xlu0 %314, %v305
  %v316 = vpop.permute.xlu0 %315
  %319 = vset.pattern.permute.xlu0 0
  %320 = vperm.xlu0 %319, %v306
  %v321 = vpop.permute.xlu0 %320
  %324 = vset.pattern.permute.xlu0 0
  %325 = vperm.xlu0 %324, %v307
  %v326 = vpop.permute.xlu0 %325
  %329 = vset.pattern.permute.xlu0 0
  %330 = vperm.xlu0 %329, %v308
  %v331 = vpop.permute.xlu0 %330
  %334 = vset.pattern.permute.xlu0 0
  %335 = vperm.xlu0 %334, %v309
  %v336 = vpop.permute.xlu0 %335
  %339 = vset.pattern.permute.xlu0 0
  %340 = vperm.xlu0 %339, %v310
  %v341 = vpop.permute.xlu0 %340
  %344 = vset.pattern.permute.xlu0 0
  %345 = vperm.xlu0 %344, %v311
  %v346 = vpop.permute.xlu0 %345
  %349 = vset.pattern.permute.xlu0 0
  %350 = vperm.xlu0 %349, %v312
  %v351 = vpop.permute.xlu0 %350
  %v361 = vunpack.c.l.b16 %v296
  %v362 = vunpack.c.l.b16 %v297
  %v363 = vunpack.c.l.b16 %v298
  %v364 = vunpack.c.l.b16 %v299
  %v365 = vunpack.c.l.b16 %v300
  %v366 = vunpack.c.l.b16 %v301
  %v367 = vunpack.c.l.b16 %v302
  %v368 = vunpack.c.l.b16 %v303
  %v369 = vpack.c.b16 %v362, %v361
  %v370 = vpack.c.b16 %v364, %v363
  %v371 = vpack.c.b16 %v366, %v365
  %v372 = vpack.c.b16 %v368, %v367
  %v374 = vsel %vm241, %v369, 0
  %v377 = vsel %vm241, %v370, 0
  %v380 = vsel %vm241, %v371, 0
  %v383 = vsel %vm241, %v372, 0
  %385 = vmatpush.bf16.msra.mxu0 0
  %386 = vmatpush.bf16.msra.mxu0 0
  %387 = vmatpush.bf16.msra.mxu0 0
  %388 = vmatpush.bf16.msra.mxu0 0
  %389 = vmatpush.bf16.msra.mxu0 %v294
  %390 = vmatpush.bf16.msra.mxu0 %v293
  %391 = vmatpush.bf16.msra.mxu0 %v292
  %392 = vmatpush.bf16.msra.mxu0 %v291
  %393 = vmatmul.bf16.gmra.mxu0 %v374
  %v394 = vpop.f32.mrf.mxu0
  %v395 = vadd.f32 %v316, %v394
  %v396 = vpop.f32.mrf.mxu0
  %v397 = vadd.f32 %v321, %v396
  %398 = vmatmul.bf16.gmra.mxu0 %v377
  %v399 = vpop.f32.mrf.mxu0
  %v400 = vadd.f32 %v326, %v399
  %v401 = vpop.f32.mrf.mxu0
  %v402 = vadd.f32 %v331, %v401
  %403 = vmatmul.bf16.gmra.mxu0 %v380
  %v404 = vpop.f32.mrf.mxu0
  %v405 = vadd.f32 %v336, %v404
  %v406 = vpop.f32.mrf.mxu0
  %v407 = vadd.f32 %v341, %v406
  %408 = vmatmul.bf16.gmra.mxu0 %v383
  %v409 = vpop.f32.mrf.mxu0
  %v410 = vadd.f32 %v346, %v409
  %v411 = vpop.f32.mrf.mxu0
  %v412 = vadd.f32 %v351, %v411
  %413 = vdwg.mxu0
  %v414 = vmax.f32 %v395, 0.0
  %v415 = vmax.f32 %v397, 0.0
  %v416 = vmax.f32 %v400, 0.0
  %v417 = vmax.f32 %v402, 0.0
  %v418 = vmax.f32 %v405, 0.0
  %v419 = vmax.f32 %v407, 0.0
  %v420 = vmax.f32 %v410, 0.0
  %v421 = vmax.f32 %v412, 0.0
  %v422 = vpack.c.bf16 %v415, %v414
  %v423 = vpack.c.bf16 %v417, %v416
  %v424 = vpack.c.bf16 %v419, %v418
  %v425 = vpack.c.bf16 %v421, %v420
  %s426 = scalar_lea.vmem %s3, 64
  %v427 = vld [vmem:[%s426] sm:$0xf]
  %v428 = vld [vmem:[%s426 + $0x4] sm:$0xf]
  %v429 = vld [vmem:[%s426 + $0x8] sm:$0xf]
  %v430 = vld [vmem:[%s426 + $0xc] sm:$0xf]
  %v431 = vld [vmem:[%s426 + $0x10] sm:$0xf]
  %v432 = vld [vmem:[%s426 + $0x14] sm:$0xf]
  %v433 = vld [vmem:[%s426 + $0x18] sm:$0xf]
  %v434 = vld [vmem:[%s426 + $0x1c] sm:$0xf]
  %s435 = scalar_lea.vmem %s4, 128
  %v436 = vld [vmem:[%s435] sm:$0xff]
  %v437 = vld [vmem:[%s435 + $0x8] sm:$0xff]
  %v438 = vld [vmem:[%s435 + $0x10] sm:$0xff]
  %v439 = vld [vmem:[%s435 + $0x18] sm:$0xff]
  %v440 = vld [vmem:[%s435 + $0x20] sm:$0xff]
  %v441 = vld [vmem:[%s435 + $0x28] sm:$0xff]
  %v442 = vld [vmem:[%s435 + $0x30] sm:$0xff]
  %v443 = vld [vmem:[%s435 + $0x38] sm:$0xff]
  %445 = vset.pattern.permute.xlu0 0
  %446 = vperm.xlu0 %445, %v436
  %v447 = vpop.permute.xlu0 %446
  %450 = vset.pattern.permute.xlu0 0
  %451 = vperm.xlu0 %450, %v437
  %v452 = vpop.permute.xlu0 %451
  %455 = vset.pattern.permute.xlu0 0
  %456 = vperm.xlu0 %455, %v438
  %v457 = vpop.permute.xlu0 %456
  %460 = vset.pattern.permute.xlu0 0
  %461 = vperm.xlu0 %460, %v439
  %v462 = vpop.permute.xlu0 %461
  %465 = vset.pattern.permute.xlu0 0
  %466 = vperm.xlu0 %465, %v440
  %v467 = vpop.permute.xlu0 %466
  %470 = vset.pattern.permute.xlu0 0
  %471 = vperm.xlu0 %470, %v441
  %v472 = vpop.permute.xlu0 %471
  %475 = vset.pattern.permute.xlu0 0
  %476 = vperm.xlu0 %475, %v442
  %v477 = vpop.permute.xlu0 %476
  %480 = vset.pattern.permute.xlu0 0
  %481 = vperm.xlu0 %480, %v443
  %v482 = vpop.permute.xlu0 %481
  %v492 = vunpack.c.l.b16 %v427
  %v493 = vunpack.c.l.b16 %v428
  %v494 = vunpack.c.l.b16 %v429
  %v495 = vunpack.c.l.b16 %v430
  %v496 = vunpack.c.l.b16 %v431
  %v497 = vunpack.c.l.b16 %v432
  %v498 = vunpack.c.l.b16 %v433
  %v499 = vunpack.c.l.b16 %v434
  %v500 = vpack.c.b16 %v493, %v492
  %v501 = vpack.c.b16 %v495, %v494
  %v502 = vpack.c.b16 %v497, %v496
  %v503 = vpack.c.b16 %v499, %v498
  %v505 = vsel %vm241, %v500, 0
  %v508 = vsel %vm241, %v501, 0
  %v511 = vsel %vm241, %v502, 0
  %v514 = vsel %vm241, %v503, 0
  %516 = vmatpush.bf16.msra.mxu0 0
  %517 = vmatpush.bf16.msra.mxu0 0
  %518 = vmatpush.bf16.msra.mxu0 0
  %519 = vmatpush.bf16.msra.mxu0 0
  %520 = vmatpush.bf16.msra.mxu0 %v425
  %521 = vmatpush.bf16.msra.mxu0 %v424
  %522 = vmatpush.bf16.msra.mxu0 %v423
  %523 = vmatpush.bf16.msra.mxu0 %v422
  %524 = vmatmul.bf16.gmra.mxu0 %v505
  %v525 = vpop.f32.mrf.mxu0
  %v526 = vadd.f32 %v447, %v525
  %v527 = vpop.f32.mrf.mxu0
  %v528 = vadd.f32 %v452, %v527
  %529 = vmatmul.bf16.gmra.mxu0 %v508
  %v530 = vpop.f32.mrf.mxu0
  %v531 = vadd.f32 %v457, %v530
  %v532 = vpop.f32.mrf.mxu0
  %v533 = vadd.f32 %v462, %v532
  %534 = vmatmul.bf16.gmra.mxu0 %v511
  %v535 = vpop.f32.mrf.mxu0
  %v536 = vadd.f32 %v467, %v535
  %v537 = vpop.f32.mrf.mxu0
  %v538 = vadd.f32 %v472, %v537
  %539 = vmatmul.bf16.gmra.mxu0 %v514
  %v540 = vpop.f32.mrf.mxu0
  %v541 = vadd.f32 %v477, %v540
  %v542 = vpop.f32.mrf.mxu0
  %v543 = vadd.f32 %v482, %v542
  %544 = vdwg.mxu0
  %v545 = vmax.f32 %v526, 0.0
  %v546 = vmax.f32 %v528, 0.0
  %v547 = vmax.f32 %v531, 0.0
  %v548 = vmax.f32 %v533, 0.0
  %v549 = vmax.f32 %v536, 0.0
  %v550 = vmax.f32 %v538, 0.0
  %v551 = vmax.f32 %v541, 0.0
  %v552 = vmax.f32 %v543, 0.0
  %v553 = vpack.c.bf16 %v546, %v545
  %v554 = vpack.c.bf16 %v548, %v547
  %v555 = vpack.c.bf16 %v550, %v549
  %v556 = vpack.c.bf16 %v552, %v551
  %s557 = scalar_lea.vmem %s3, 96
  %v558 = vld [vmem:[%s557] sm:$0xf]
  %v559 = vld [vmem:[%s557 + $0x4] sm:$0xf]
  %v560 = vld [vmem:[%s557 + $0x8] sm:$0xf]
  %v561 = vld [vmem:[%s557 + $0xc] sm:$0xf]
  %v562 = vld [vmem:[%s557 + $0x10] sm:$0xf]
  %v563 = vld [vmem:[%s557 + $0x14] sm:$0xf]
  %v564 = vld [vmem:[%s557 + $0x18] sm:$0xf]
  %v565 = vld [vmem:[%s557 + $0x1c] sm:$0xf]
  %s566 = scalar_lea.vmem %s4, 192
  %v567 = vld [vmem:[%s566] sm:$0xff]
  %v568 = vld [vmem:[%s566 + $0x8] sm:$0xff]
  %v569 = vld [vmem:[%s566 + $0x10] sm:$0xff]
  %v570 = vld [vmem:[%s566 + $0x18] sm:$0xff]
  %v571 = vld [vmem:[%s566 + $0x20] sm:$0xff]
  %v572 = vld [vmem:[%s566 + $0x28] sm:$0xff]
  %v573 = vld [vmem:[%s566 + $0x30] sm:$0xff]
  %v574 = vld [vmem:[%s566 + $0x38] sm:$0xff]
  %576 = vset.pattern.permute.xlu0 0
  %577 = vperm.xlu0 %576, %v567
  %v578 = vpop.permute.xlu0 %577
  %581 = vset.pattern.permute.xlu0 0
  %582 = vperm.xlu0 %581, %v568
  %v583 = vpop.permute.xlu0 %582
  %586 = vset.pattern.permute.xlu0 0
  %587 = vperm.xlu0 %586, %v569
  %v588 = vpop.permute.xlu0 %587
  %591 = vset.pattern.permute.xlu0 0
  %592 = vperm.xlu0 %591, %v570
  %v593 = vpop.permute.xlu0 %592
  %596 = vset.pattern.permute.xlu0 0
  %597 = vperm.xlu0 %596, %v571
  %v598 = vpop.permute.xlu0 %597
  %601 = vset.pattern.permute.xlu0 0
  %602 = vperm.xlu0 %601, %v572
  %v603 = vpop.permute.xlu0 %602
  %606 = vset.pattern.permute.xlu0 0
  %607 = vperm.xlu0 %606, %v573
  %v608 = vpop.permute.xlu0 %607
  %611 = vset.pattern.permute.xlu0 0
  %612 = vperm.xlu0 %611, %v574
  %v613 = vpop.permute.xlu0 %612
  %v623 = vunpack.c.l.b16 %v558
  %v624 = vunpack.c.l.b16 %v559
  %v625 = vunpack.c.l.b16 %v560
  %v626 = vunpack.c.l.b16 %v561
  %v627 = vunpack.c.l.b16 %v562
  %v628 = vunpack.c.l.b16 %v563
  %v629 = vunpack.c.l.b16 %v564
  %v630 = vunpack.c.l.b16 %v565
  %v631 = vpack.c.b16 %v624, %v623
  %v632 = vpack.c.b16 %v626, %v625
  %v633 = vpack.c.b16 %v628, %v627
  %v634 = vpack.c.b16 %v630, %v629
  %v636 = vsel %vm241, %v631, 0
  %v639 = vsel %vm241, %v632, 0
  %v642 = vsel %vm241, %v633, 0
  %v645 = vsel %vm241, %v634, 0
  %647 = vmatpush.bf16.msra.mxu0 0
  %648 = vmatpush.bf16.msra.mxu0 0
  %649 = vmatpush.bf16.msra.mxu0 0
  %650 = vmatpush.bf16.msra.mxu0 0
  %651 = vmatpush.bf16.msra.mxu0 %v556
  %652 = vmatpush.bf16.msra.mxu0 %v555
  %653 = vmatpush.bf16.msra.mxu0 %v554
  %654 = vmatpush.bf16.msra.mxu0 %v553
  %655 = vmatmul.bf16.gmra.mxu0 %v636
  %v656 = vpop.f32.mrf.mxu0
  %v657 = vadd.f32 %v578, %v656
  %v658 = vpop.f32.mrf.mxu0
  %v659 = vadd.f32 %v583, %v658
  %660 = vmatmul.bf16.gmra.mxu0 %v639
  %v661 = vpop.f32.mrf.mxu0
  %v662 = vadd.f32 %v588, %v661
  %v663 = vpop.f32.mrf.mxu0
  %v664 = vadd.f32 %v593, %v663
  %665 = vmatmul.bf16.gmra.mxu0 %v642
  %v666 = vpop.f32.mrf.mxu0
  %v667 = vadd.f32 %v598, %v666
  %v668 = vpop.f32.mrf.mxu0
  %v669 = vadd.f32 %v603, %v668
  %670 = vmatmul.bf16.gmra.mxu0 %v645
  %v671 = vpop.f32.mrf.mxu0
  %v672 = vadd.f32 %v608, %v671
  %v673 = vpop.f32.mrf.mxu0
  %v674 = vadd.f32 %v613, %v673
  %675 = vdwg.mxu0
  %v676 = vmax.f32 %v657, 0.0
  %v677 = vmax.f32 %v659, 0.0
  %v678 = vmax.f32 %v662, 0.0
  %v679 = vmax.f32 %v664, 0.0
  %v680 = vmax.f32 %v667, 0.0
  %v681 = vmax.f32 %v669, 0.0
  %v682 = vmax.f32 %v672, 0.0
  %v683 = vmax.f32 %v674, 0.0
  %v684 = vpack.c.bf16 %v677, %v676
  %v685 = vpack.c.bf16 %v679, %v678
  %v686 = vpack.c.bf16 %v681, %v680
  %v687 = vpack.c.bf16 %v683, %v682
  %s688 = scalar_lea.vmem %s3, 128
  %v689 = vld [vmem:[%s688] sm:$0xf]
  %v690 = vld [vmem:[%s688 + $0x4] sm:$0xf]
  %v691 = vld [vmem:[%s688 + $0x8] sm:$0xf]
  %v692 = vld [vmem:[%s688 + $0xc] sm:$0xf]
  %v693 = vld [vmem:[%s688 + $0x10] sm:$0xf]
  %v694 = vld [vmem:[%s688 + $0x14] sm:$0xf]
  %v695 = vld [vmem:[%s688 + $0x18] sm:$0xf]
  %v696 = vld [vmem:[%s688 + $0x1c] sm:$0xf]
  %s697 = scalar_lea.vmem %s4, 256
  %v698 = vld [vmem:[%s697] sm:$0xff]
  %v699 = vld [vmem:[%s697 + $0x8] sm:$0xff]
  %v700 = vld [vmem:[%s697 + $0x10] sm:$0xff]
  %v701 = vld [vmem:[%s697 + $0x18] sm:$0xff]
  %v702 = vld [vmem:[%s697 + $0x20] sm:$0xff]
  %v703 = vld [vmem:[%s697 + $0x28] sm:$0xff]
  %v704 = vld [vmem:[%s697 + $0x30] sm:$0xff]
  %v705 = vld [vmem:[%s697 + $0x38] sm:$0xff]
  %707 = vset.pattern.permute.xlu0 0
  %708 = vperm.xlu0 %707, %v698
  %v709 = vpop.permute.xlu0 %708
  %712 = vset.pattern.permute.xlu0 0
  %713 = vperm.xlu0 %712, %v699
  %v714 = vpop.permute.xlu0 %713
  %717 = vset.pattern.permute.xlu0 0
  %718 = vperm.xlu0 %717, %v700
  %v719 = vpop.permute.xlu0 %718
  %722 = vset.pattern.permute.xlu0 0
  %723 = vperm.xlu0 %722, %v701
  %v724 = vpop.permute.xlu0 %723
  %727 = vset.pattern.permute.xlu0 0
  %728 = vperm.xlu0 %727, %v702
  %v729 = vpop.permute.xlu0 %728
  %732 = vset.pattern.permute.xlu0 0
  %733 = vperm.xlu0 %732, %v703
  %v734 = vpop.permute.xlu0 %733
  %737 = vset.pattern.permute.xlu0 0
  %738 = vperm.xlu0 %737, %v704
  %v739 = vpop.permute.xlu0 %738
  %742 = vset.pattern.permute.xlu0 0
  %743 = vperm.xlu0 %742, %v705
  %v744 = vpop.permute.xlu0 %743
  %v754 = vunpack.c.l.b16 %v689
  %v755 = vunpack.c.l.b16 %v690
  %v756 = vunpack.c.l.b16 %v691
  %v757 = vunpack.c.l.b16 %v692
  %v758 = vunpack.c.l.b16 %v693
  %v759 = vunpack.c.l.b16 %v694
  %v760 = vunpack.c.l.b16 %v695
  %v761 = vunpack.c.l.b16 %v696
  %v762 = vpack.c.b16 %v755, %v754
  %v763 = vpack.c.b16 %v757, %v756
  %v764 = vpack.c.b16 %v759, %v758
  %v765 = vpack.c.b16 %v761, %v760
  %v767 = vsel %vm241, %v762, 0
  %v770 = vsel %vm241, %v763, 0
  %v773 = vsel %vm241, %v764, 0
  %v776 = vsel %vm241, %v765, 0
  %778 = vmatpush.bf16.msra.mxu0 0
  %779 = vmatpush.bf16.msra.mxu0 0
  %780 = vmatpush.bf16.msra.mxu0 0
  %781 = vmatpush.bf16.msra.mxu0 0
  %782 = vmatpush.bf16.msra.mxu0 %v687
  %783 = vmatpush.bf16.msra.mxu0 %v686
  %784 = vmatpush.bf16.msra.mxu0 %v685
  %785 = vmatpush.bf16.msra.mxu0 %v684
  %786 = vmatmul.bf16.gmra.mxu0 %v767
  %v787 = vpop.f32.mrf.mxu0
  %v788 = vadd.f32 %v709, %v787
  %v789 = vpop.f32.mrf.mxu0
  %v790 = vadd.f32 %v714, %v789
  %791 = vmatmul.bf16.gmra.mxu0 %v770
  %v792 = vpop.f32.mrf.mxu0
  %v793 = vadd.f32 %v719, %v792
  %v794 = vpop.f32.mrf.mxu0
  %v795 = vadd.f32 %v724, %v794
  %796 = vmatmul.bf16.gmra.mxu0 %v773
  %v797 = vpop.f32.mrf.mxu0
  %v798 = vadd.f32 %v729, %v797
  %v799 = vpop.f32.mrf.mxu0
  %v800 = vadd.f32 %v734, %v799
  %801 = vmatmul.bf16.gmra.mxu0 %v776
  %v802 = vpop.f32.mrf.mxu0
  %v803 = vadd.f32 %v739, %v802
  %v804 = vpop.f32.mrf.mxu0
  %v805 = vadd.f32 %v744, %v804
  %806 = vdwg.mxu0
  %v807 = vmax.f32 %v788, 0.0
  %v808 = vmax.f32 %v790, 0.0
  %v809 = vmax.f32 %v793, 0.0
  %v810 = vmax.f32 %v795, 0.0
  %v811 = vmax.f32 %v798, 0.0
  %v812 = vmax.f32 %v800, 0.0
  %v813 = vmax.f32 %v803, 0.0
  %v814 = vmax.f32 %v805, 0.0
  %v815 = vpack.c.bf16 %v808, %v807
  %v816 = vpack.c.bf16 %v810, %v809
  %v817 = vpack.c.bf16 %v812, %v811
  %v818 = vpack.c.bf16 %v814, %v813
  %v819 = vld [vmem:[%s5] sm:$0x7]
  %v820 = vld [vmem:[%s6] sm:$0x1f]
  %822 = vset.pattern.permute.xlu0 0
  %823 = vperm.xlu0 %822, %v820
  %v824 = vpop.permute.xlu0 %823
  %v827 = vsel %vm241, %v819, 0
  %829 = vmatpush.bf16.msra.mxu0 0
  %830 = vmatpush.bf16.msra.mxu0 0
  %831 = vmatpush.bf16.msra.mxu0 0
  %832 = vmatpush.bf16.msra.mxu0 0
  %833 = vmatpush.bf16.msra.mxu0 %v818
  %834 = vmatpush.bf16.msra.mxu0 %v817
  %835 = vmatpush.bf16.msra.mxu0 %v816
  %836 = vmatpush.bf16.msra.mxu0 %v815
  %837 = vmatmul.bf16.gmra.mxu0 %v827
  %v838 = vpop.f32.mrf.mxu0
  %v839 = vadd.f32 %v824, %v838
  %v840 = vpop.f32.mrf.mxu0
  %841 = vdwg.mxu0
  %842 = vst [vmem:[%s7] sm:$0x1f] %v839
  // Predicated region
  $region30: #{acasx_forward.1} parent=0 // pred_check
    _
  $region31: #{acasx_forward.1} parent=0 // pred_check_branch
    %844 = sbr.rel (0) target = $region33
  $region32: #{acasx_forward.1} parent=0 // pred_region
    _
  $region33: #{acasx_forward.1} parent=0 // pred_fallthru
    _
  // Predicated region
  $region34: #{acasx_forward.1} parent=0 // pred_check
    _
  $region35: #{acasx_forward.1} parent=0 // pred_check_branch
    %846 = sbr.rel (0) target = $region37
  $region36: #{acasx_forward.1} parent=0 // pred_region
    _
  $region37: #{acasx_forward.1} parent=0 // pred_fallthru
    _

</llo_original>
